<compile_context>
chip_gen: v6e
topology: v6e:2x2x1
jax: 0.10.0
libtpu: 0.0.40
codegen_flags: <defaults>
</compile_context>

<pallas_src>
import jax
import jax.numpy as jnp
from jax import lax
from jax.experimental import pallas as pl
from jax.experimental.pallas import tpu as pltpu


def _tap_offsets():
    # 3x3 taps in PyTorch (ky, kx) order, expressed as (dy, dx) = (ky - 1, kx - 1).
    return [(k // 3 - 1, k % 3 - 1) for k in range(9)]


def _make_resblock_kernel(W, L, C, res_scale):
    """W: image width; L: lane width of one slab (= imgs_per_step * padded H*W)."""

    def kernel(x_ref, m_ref, w1_ref, w2_ref, o_ref):
        x = x_ref[0]                                   # (C, L) f32, lane-dense

        ones = jnp.ones((1, L), jnp.float32)           # bias row, built once, reused

        def patches(act):
            # im2col slab (9C + 1, L) kept in vregs (never written to VMEM).
            rows = []
            for k, (dy, dx) in enumerate(_tap_offsets()):
                if dy == 0 and dx == 0:
                    rows.append(act)                   # center tap: no roll, no mask
                else:
                    s = dy * W + dx                    # flat lane shift, |s| <= W + 1
                    shifted = pltpu.roll(act, (-s) % L, axis=1)   # XLU slot (free-ish)
                    rows.append(shifted * m_ref[k:k + 1, :])
            rows.append(ones)                          # bias folded into the matmul
            return jnp.concatenate(rows, axis=0)       # (9C + 1, L)

        # conv1 + bias + ReLU : one (C, 9C+1) x (9C+1, L) MXU contraction.
        a = jnp.dot(w1_ref[...], patches(x), preferred_element_type=jnp.float32)
        a = jnp.maximum(a, 0.0)

        # conv2 + bias.
        a = jnp.dot(w2_ref[...], patches(a), preferred_element_type=jnp.float32)

        # residual scaling + skip connection (unmasked lane-dense store).
        o_ref[0] = (a * res_scale + x).astype(o_ref.dtype)

    return kernel


def _tap_masks(H, W, HWp):
    """(9, HWp) f32 masks: 1 where a tap reads a real in-image pixel, 0 where it
    falls in the conv zero-padding, would wrap a row edge when flattened, or sits
    in the lane padding beyond H*W."""
    idx = jnp.arange(HWp, dtype=jnp.int32)
    hi, wi = idx // W, idx % W
    masks = []
    for dy, dx in _tap_offsets():
        valid = ((idx < H * W) &
                 (hi + dy >= 0) & (hi + dy < H) &
                 (wi + dx >= 0) & (wi + dx < W))
        masks.append(valid.astype(jnp.float32))
    return jnp.stack(masks, axis=0)


def residual_block_pallas(x_nchw, w1_oihw, b1, w2_oihw, b2, res_scale=0.1,
                          imgs_per_step=None):
    """x: (N, C, H, W) f32; w*: (C, C, 3, 3) PyTorch OIHW; b*: (C,)."""
    N, C, H, W = x_nchw.shape
    HW = H * W
    HWp = ((HW + 127) // 128) * 128        # lane-pad each image to a multiple of 128

    if imgs_per_step is None:
        # Fold the (tiny) batch into lanes: largest divisor of N whose slab stays
        # <= ~1024 lanes.  On v7x (2 TensorCores) prefer a value that keeps the
        # grid at >= 2 steps when the batch allows.
        target = max(1, 1024 // HWp)
        imgs_per_step = max(d for d in range(1, N + 1) if N % d == 0 and d <= target)
    assert N % imgs_per_step == 0, "imgs_per_step must divide the batch"
    G = N // imgs_per_step
    L = imgs_per_step * HWp

    # Pack images along lanes: (G, C, imgs_per_step * HWp).  Tiny XLA transpose
    # outside the kernel; the kernel itself DMAs x exactly once per step.
    x_flat = x_nchw.reshape(N, C, HW)
    if HWp != HW:
        x_flat = jnp.pad(x_flat, ((0, 0), (0, 0), (0, HWp - HW)))
    x_pack = (x_flat.reshape(G, imgs_per_step, C, HWp)
              .transpose(0, 2, 1, 3)
              .reshape(G, C, L))

    # (Cout, 9*Cin + 1): column (ky*3 + kx)*Cin + i  <->  weight[o, i, ky, kx];
    # the last column holds the bias (matches the ones-row in the patch slab).
    def pack_w(w, b):
        wm = jnp.transpose(w, (0, 2, 3, 1)).reshape(C, 9 * C)
        return jnp.concatenate([wm, b.reshape(C, 1)], axis=1)

    w1m = pack_w(w1_oihw, b1)
    w2m = pack_w(w2_oihw, b2)
    masks = jnp.tile(_tap_masks(H, W, HWp), (1, imgs_per_step))   # (9, L)

    kernel = _make_resblock_kernel(W, L, C, res_scale)

    cost = pl.CostEstimate(
        flops=2 * 2 * C * (9 * C + 1) * HW * N,
        transcendentals=0,
        bytes_accessed=4 * (2 * N * C * HW + 2 * C * (9 * C + 1) + 9 * L),
    )

    out_pack = pl.pallas_call(
        kernel,
        out_shape=jax.ShapeDtypeStruct((G, C, L), x_pack.dtype),
        grid_spec=pltpu.PrefetchScalarGridSpec(
            num_scalar_prefetch=0,
            grid=(G,),
            in_specs=[
                pl.BlockSpec((1, C, L), lambda g: (g, 0, 0)),     # x (conv input + residual)
                pl.BlockSpec((9, L), lambda g: (0, 0)),           # border/wrap masks
                pl.BlockSpec((C, 9 * C + 1), lambda g: (0, 0)),   # w1 | b1
                pl.BlockSpec((C, 9 * C + 1), lambda g: (0, 0)),   # w2 | b2
            ],
            out_specs=pl.BlockSpec((1, C, L), lambda g: (g, 0, 0)),
        ),
        compiler_params=pltpu.CompilerParams(
            dimension_semantics=("parallel",)),
        cost_estimate=cost,
    )(x_pack, masks, w1m, w2m)

    out_flat = (out_pack.reshape(G, C, imgs_per_step, HWp)
                .transpose(0, 2, 1, 3)
                .reshape(N, C, HWp)[:, :, :HW])
    return out_flat.reshape(N, C, H, W)


def residual_block_reference_nchw(x_nchw, w1_oihw, b1, w2_oihw, b2, res_scale=0.1):
    """Pure-JAX reference matching PyTorch Conv2d semantics (NCHW / OIHW)."""
    dn = ("NCHW", "OIHW", "NCHW")
    out = lax.conv_general_dilated(x_nchw, w1_oihw, (1, 1), ((1, 1), (1, 1)),
                                   dimension_numbers=dn)
    out = jnp.maximum(out + b1[None, :, None, None], 0.0)
    out = lax.conv_general_dilated(out, w2_oihw, (1, 1), ((1, 1), (1, 1)),
                                   dimension_numbers=dn)
    out = out + b2[None, :, None, None]
    return out * res_scale + x_nchw


if __name__ == "__main__":
    key = jax.random.PRNGKey(0)
    k_x, k_w1, k_b1, k_w2, k_b2 = jax.random.split(key, 5)

    N, C, H, W = 2, 4, 16, 16
    res_scale = 0.1

    x = jax.random.normal(k_x, (N, C, H, W), jnp.float32)
    w1 = jax.random.normal(k_w1, (C, C, 3, 3), jnp.float32) * 0.1
    b1 = jax.random.normal(k_b1, (C,), jnp.float32) * 0.1
    w2 = jax.random.normal(k_w2, (C, C, 3, 3), jnp.float32) * 0.1
    b2 = jax.random.normal(k_b2, (C,), jnp.float32) * 0.1

    out = residual_block_pallas(x, w1, b1, w2, b2, res_scale)
    out = jax.block_until_ready(out)

    ref = residual_block_reference_nchw(x, w1, b1, w2, b2, res_scale)
    ref = jax.block_until_ready(ref)

    assert out.shape == (N, C, H, W)
    max_err = float(jnp.max(jnp.abs(out - ref)))
    assert jnp.allclose(out, ref, atol=5e-4, rtol=5e-4), max_err

    print("KERNEL_OK")
</pallas_src>

<mosaic_0001>
module attributes {stable_mosaic.version = 11 : i64} {
  func.func @kernel(%arg0: i32, %arg1: memref<1x4x512xf32, #tpu.memory_space<vmem>>, %arg2: memref<9x512xf32, #tpu.memory_space<vmem>>, %arg3: memref<4x37xf32, #tpu.memory_space<vmem>>, %arg4: memref<4x37xf32, #tpu.memory_space<vmem>>, %arg5: memref<1x4x512xf32, #tpu.memory_space<vmem>>) attributes {dimension_semantics = [#tpu.dimension_semantics<parallel>], iteration_bounds = array<i64: 1>, scalar_prefetch = 0 : i64, scratch_operands = 0 : i64, tpu.core_type = #tpu.core_type<tc>, window_params = [{transform_indices = @transform_0, window_bounds = array<i64: 1, 4, 512>}, {pipeline_mode = #tpu.pipeline_mode<synchronous>, transform_indices = @transform_1, window_bounds = array<i64: 9, 512>}, {pipeline_mode = #tpu.pipeline_mode<synchronous>, transform_indices = @transform_2, window_bounds = array<i64: 4, 37>}, {pipeline_mode = #tpu.pipeline_mode<synchronous>, transform_indices = @transform_3, window_bounds = array<i64: 4, 37>}, {transform_indices = @transform_4, window_bounds = array<i64: 1, 4, 512>}]} {
    %c0 = arith.constant 0 : index
    %c0_0 = arith.constant 0 : index
    %c0_1 = arith.constant 0 : index
    %0 = vector.load %arg1[%c0, %c0_0, %c0_1] : memref<1x4x512xf32, #tpu.memory_space<vmem>>, vector<1x4x512xf32>
    %1 = vector.shape_cast %0 : vector<1x4x512xf32> to vector<4x512xf32>
    %cst = arith.constant 1.000000e+00 : f32
    %2 = vector.broadcast %cst : f32 to vector<1x512xf32>
    %c0_2 = arith.constant 0 : index
    %c0_3 = arith.constant 0 : index
    %3 = vector.load %arg3[%c0_2, %c0_3] : memref<4x37xf32, #tpu.memory_space<vmem>>, vector<4x37xf32>
    %c17_i32 = arith.constant 17 : i32
    %4 = tpu.dynamic_rotate %1 by %c17_i32 dim 1 : vector<4x512xf32>, i32 -> vector<4x512xf32>
    %c0_4 = arith.constant 0 : index
    %c0_5 = arith.constant 0 : index
    %5 = vector.load %arg2[%c0_4, %c0_5] : memref<9x512xf32, #tpu.memory_space<vmem>>, vector<1x512xf32>
    %6 = vector.broadcast %5 : vector<1x512xf32> to vector<4x512xf32>
    %7 = arith.mulf %4, %6 : vector<4x512xf32>
    %c16_i32 = arith.constant 16 : i32
    %8 = tpu.dynamic_rotate %1 by %c16_i32 dim 1 : vector<4x512xf32>, i32 -> vector<4x512xf32>
    %c1 = arith.constant 1 : index
    %c0_6 = arith.constant 0 : index
    %9 = vector.load %arg2[%c1, %c0_6] : memref<9x512xf32, #tpu.memory_space<vmem>>, vector<1x512xf32>
    %10 = vector.broadcast %9 : vector<1x512xf32> to vector<4x512xf32>
    %11 = arith.mulf %8, %10 : vector<4x512xf32>
    %c15_i32 = arith.constant 15 : i32
    %12 = tpu.dynamic_rotate %1 by %c15_i32 dim 1 : vector<4x512xf32>, i32 -> vector<4x512xf32>
    %c2 = arith.constant 2 : index
    %c0_7 = arith.constant 0 : index
    %13 = vector.load %arg2[%c2, %c0_7] : memref<9x512xf32, #tpu.memory_space<vmem>>, vector<1x512xf32>
    %14 = vector.broadcast %13 : vector<1x512xf32> to vector<4x512xf32>
    %15 = arith.mulf %12, %14 : vector<4x512xf32>
    %c1_i32 = arith.constant 1 : i32
    %16 = tpu.dynamic_rotate %1 by %c1_i32 dim 1 : vector<4x512xf32>, i32 -> vector<4x512xf32>
    %c3 = arith.constant 3 : index
    %c0_8 = arith.constant 0 : index
    %17 = vector.load %arg2[%c3, %c0_8] : memref<9x512xf32, #tpu.memory_space<vmem>>, vector<1x512xf32>
    %18 = vector.broadcast %17 : vector<1x512xf32> to vector<4x512xf32>
    %19 = arith.mulf %16, %18 : vector<4x512xf32>
    %c511_i32 = arith.constant 511 : i32
    %20 = tpu.dynamic_rotate %1 by %c511_i32 dim 1 : vector<4x512xf32>, i32 -> vector<4x512xf32>
    %c5 = arith.constant 5 : index
    %c0_9 = arith.constant 0 : index
    %21 = vector.load %arg2[%c5, %c0_9] : memref<9x512xf32, #tpu.memory_space<vmem>>, vector<1x512xf32>
    %22 = vector.broadcast %21 : vector<1x512xf32> to vector<4x512xf32>
    %23 = arith.mulf %20, %22 : vector<4x512xf32>
    %c497_i32 = arith.constant 497 : i32
    %24 = tpu.dynamic_rotate %1 by %c497_i32 dim 1 : vector<4x512xf32>, i32 -> vector<4x512xf32>
    %c6 = arith.constant 6 : index
    %c0_10 = arith.constant 0 : index
    %25 = vector.load %arg2[%c6, %c0_10] : memref<9x512xf32, #tpu.memory_space<vmem>>, vector<1x512xf32>
    %26 = vector.broadcast %25 : vector<1x512xf32> to vector<4x512xf32>
    %27 = arith.mulf %24, %26 : vector<4x512xf32>
    %c496_i32 = arith.constant 496 : i32
    %28 = tpu.dynamic_rotate %1 by %c496_i32 dim 1 : vector<4x512xf32>, i32 -> vector<4x512xf32>
    %c7 = arith.constant 7 : index
    %c0_11 = arith.constant 0 : index
    %29 = vector.load %arg2[%c7, %c0_11] : memref<9x512xf32, #tpu.memory_space<vmem>>, vector<1x512xf32>
    %30 = vector.broadcast %29 : vector<1x512xf32> to vector<4x512xf32>
    %31 = arith.mulf %28, %30 : vector<4x512xf32>
    %c495_i32 = arith.constant 495 : i32
    %32 = tpu.dynamic_rotate %1 by %c495_i32 dim 1 : vector<4x512xf32>, i32 -> vector<4x512xf32>
    %c8 = arith.constant 8 : index
    %c0_12 = arith.constant 0 : index
    %33 = vector.load %arg2[%c8, %c0_12] : memref<9x512xf32, #tpu.memory_space<vmem>>, vector<1x512xf32>
    %34 = vector.broadcast %33 : vector<1x512xf32> to vector<4x512xf32>
    %35 = arith.mulf %32, %34 : vector<4x512xf32>
    %36 = tpu.concatenate %7, %11, %15, %19, %1, %23, %27, %31, %35, %2 in 0 : vector<4x512xf32>, vector<4x512xf32>, vector<4x512xf32>, vector<4x512xf32>, vector<4x512xf32>, vector<4x512xf32>, vector<4x512xf32>, vector<4x512xf32>, vector<4x512xf32>, vector<1x512xf32> -> vector<37x512xf32>
    %cst_13 = arith.constant dense<0.000000e+00> : vector<4x512xf32>
    %37 = tpu.matmul %3, %36, %cst_13 {dimension_numbers = #tpu.dot_dimension_numbers<[1], [0], [0], [1], [0, 0, 1, 1], [], []>} : vector<4x37xf32>, vector<37x512xf32>, vector<4x512xf32> -> vector<4x512xf32>
    %cst_14 = arith.constant 0.000000e+00 : f32
    %38 = vector.broadcast %cst_14 : f32 to vector<4x512xf32>
    %39 = arith.maximumf %37, %38 : vector<4x512xf32>
    %c0_15 = arith.constant 0 : index
    %c0_16 = arith.constant 0 : index
    %40 = vector.load %arg4[%c0_15, %c0_16] : memref<4x37xf32, #tpu.memory_space<vmem>>, vector<4x37xf32>
    %c17_i32_17 = arith.constant 17 : i32
    %41 = tpu.dynamic_rotate %39 by %c17_i32_17 dim 1 : vector<4x512xf32>, i32 -> vector<4x512xf32>
    %c0_18 = arith.constant 0 : index
    %c0_19 = arith.constant 0 : index
    %42 = vector.load %arg2[%c0_18, %c0_19] : memref<9x512xf32, #tpu.memory_space<vmem>>, vector<1x512xf32>
    %43 = vector.broadcast %42 : vector<1x512xf32> to vector<4x512xf32>
    %44 = arith.mulf %41, %43 : vector<4x512xf32>
    %c16_i32_20 = arith.constant 16 : i32
    %45 = tpu.dynamic_rotate %39 by %c16_i32_20 dim 1 : vector<4x512xf32>, i32 -> vector<4x512xf32>
    %c1_21 = arith.constant 1 : index
    %c0_22 = arith.constant 0 : index
    %46 = vector.load %arg2[%c1_21, %c0_22] : memref<9x512xf32, #tpu.memory_space<vmem>>, vector<1x512xf32>
    %47 = vector.broadcast %46 : vector<1x512xf32> to vector<4x512xf32>
    %48 = arith.mulf %45, %47 : vector<4x512xf32>
    %c15_i32_23 = arith.constant 15 : i32
    %49 = tpu.dynamic_rotate %39 by %c15_i32_23 dim 1 : vector<4x512xf32>, i32 -> vector<4x512xf32>
    %c2_24 = arith.constant 2 : index
    %c0_25 = arith.constant 0 : index
    %50 = vector.load %arg2[%c2_24, %c0_25] : memref<9x512xf32, #tpu.memory_space<vmem>>, vector<1x512xf32>
    %51 = vector.broadcast %50 : vector<1x512xf32> to vector<4x512xf32>
    %52 = arith.mulf %49, %51 : vector<4x512xf32>
    %c1_i32_26 = arith.constant 1 : i32
    %53 = tpu.dynamic_rotate %39 by %c1_i32_26 dim 1 : vector<4x512xf32>, i32 -> vector<4x512xf32>
    %c3_27 = arith.constant 3 : index
    %c0_28 = arith.constant 0 : index
    %54 = vector.load %arg2[%c3_27, %c0_28] : memref<9x512xf32, #tpu.memory_space<vmem>>, vector<1x512xf32>
    %55 = vector.broadcast %54 : vector<1x512xf32> to vector<4x512xf32>
    %56 = arith.mulf %53, %55 : vector<4x512xf32>
    %c511_i32_29 = arith.constant 511 : i32
    %57 = tpu.dynamic_rotate %39 by %c511_i32_29 dim 1 : vector<4x512xf32>, i32 -> vector<4x512xf32>
    %c5_30 = arith.constant 5 : index
    %c0_31 = arith.constant 0 : index
    %58 = vector.load %arg2[%c5_30, %c0_31] : memref<9x512xf32, #tpu.memory_space<vmem>>, vector<1x512xf32>
    %59 = vector.broadcast %58 : vector<1x512xf32> to vector<4x512xf32>
    %60 = arith.mulf %57, %59 : vector<4x512xf32>
    %c497_i32_32 = arith.constant 497 : i32
    %61 = tpu.dynamic_rotate %39 by %c497_i32_32 dim 1 : vector<4x512xf32>, i32 -> vector<4x512xf32>
    %c6_33 = arith.constant 6 : index
    %c0_34 = arith.constant 0 : index
    %62 = vector.load %arg2[%c6_33, %c0_34] : memref<9x512xf32, #tpu.memory_space<vmem>>, vector<1x512xf32>
    %63 = vector.broadcast %62 : vector<1x512xf32> to vector<4x512xf32>
    %64 = arith.mulf %61, %63 : vector<4x512xf32>
    %c496_i32_35 = arith.constant 496 : i32
    %65 = tpu.dynamic_rotate %39 by %c496_i32_35 dim 1 : vector<4x512xf32>, i32 -> vector<4x512xf32>
    %c7_36 = arith.constant 7 : index
    %c0_37 = arith.constant 0 : index
    %66 = vector.load %arg2[%c7_36, %c0_37] : memref<9x512xf32, #tpu.memory_space<vmem>>, vector<1x512xf32>
    %67 = vector.broadcast %66 : vector<1x512xf32> to vector<4x512xf32>
    %68 = arith.mulf %65, %67 : vector<4x512xf32>
    %c495_i32_38 = arith.constant 495 : i32
    %69 = tpu.dynamic_rotate %39 by %c495_i32_38 dim 1 : vector<4x512xf32>, i32 -> vector<4x512xf32>
    %c8_39 = arith.constant 8 : index
    %c0_40 = arith.constant 0 : index
    %70 = vector.load %arg2[%c8_39, %c0_40] : memref<9x512xf32, #tpu.memory_space<vmem>>, vector<1x512xf32>
    %71 = vector.broadcast %70 : vector<1x512xf32> to vector<4x512xf32>
    %72 = arith.mulf %69, %71 : vector<4x512xf32>
    %73 = tpu.concatenate %44, %48, %52, %56, %39, %60, %64, %68, %72, %2 in 0 : vector<4x512xf32>, vector<4x512xf32>, vector<4x512xf32>, vector<4x512xf32>, vector<4x512xf32>, vector<4x512xf32>, vector<4x512xf32>, vector<4x512xf32>, vector<4x512xf32>, vector<1x512xf32> -> vector<37x512xf32>
    %cst_41 = arith.constant dense<0.000000e+00> : vector<4x512xf32>
    %74 = tpu.matmul %40, %73, %cst_41 {dimension_numbers = #tpu.dot_dimension_numbers<[1], [0], [0], [1], [0, 0, 1, 1], [], []>} : vector<4x37xf32>, vector<37x512xf32>, vector<4x512xf32> -> vector<4x512xf32>
    %cst_42 = arith.constant 1.000000e-01 : f32
    %75 = vector.broadcast %cst_42 : f32 to vector<4x512xf32>
    %76 = arith.mulf %74, %75 : vector<4x512xf32>
    %77 = arith.addf %76, %1 : vector<4x512xf32>
    %c0_43 = arith.constant 0 : index
    %c0_44 = arith.constant 0 : index
    %c0_45 = arith.constant 0 : index
    %78 = vector.load %arg5[%c0_43, %c0_44, %c0_45] : memref<1x4x512xf32, #tpu.memory_space<vmem>>, vector<1x4x512xf32>
    %79 = vector.shape_cast %78 : vector<1x4x512xf32> to vector<4x512xf32>
    %80 = vector.shape_cast %77 : vector<4x512xf32> to vector<1x4x512xf32>
    tpu.vector_store %arg5[%c0_43, %c0_44, %c0_45], %80 {strides = array<i32>} : memref<1x4x512xf32, #tpu.memory_space<vmem>>, vector<1x4x512xf32>,
    return
  }
  func.func @transform_0(%arg0: i32) -> (i32, i32, i32) {
    %c0_i32 = arith.constant 0 : i32
    %c0_i32_0 = arith.constant 0 : i32
    %c0_i32_1 = arith.constant 0 : i32
    return %arg0, %c0_i32, %c0_i32_0 : i32, i32, i32
  }
  func.func @transform_1(%arg0: i32) -> (i32, i32) {
    %c0_i32 = arith.constant 0 : i32
    %c0_i32_0 = arith.constant 0 : i32
    %c0_i32_1 = arith.constant 0 : i32
    return %c0_i32, %c0_i32_0 : i32, i32
  }
  func.func @transform_2(%arg0: i32) -> (i32, i32) {
    %c0_i32 = arith.constant 0 : i32
    %c0_i32_0 = arith.constant 0 : i32
    %c0_i32_1 = arith.constant 0 : i32
    return %c0_i32, %c0_i32_0 : i32, i32
  }
  func.func @transform_3(%arg0: i32) -> (i32, i32) {
    %c0_i32 = arith.constant 0 : i32
    %c0_i32_0 = arith.constant 0 : i32
    %c0_i32_1 = arith.constant 0 : i32
    return %c0_i32, %c0_i32_0 : i32, i32
  }
  func.func @transform_4(%arg0: i32) -> (i32, i32, i32) {
    %c0_i32 = arith.constant 0 : i32
    %c0_i32_0 = arith.constant 0 : i32
    %c0_i32_1 = arith.constant 0 : i32
    return %arg0, %c0_i32, %c0_i32_0 : i32, i32, i32
  }
}

</mosaic_0001>

<llo_original>
// kernel: tpu_custom_call.1
$region0: #{tpu_custom_call.1}
  #allocation0 [shape = 'u32[]', space=smem, size = 0x4, offset = 0x4, fixed_abs, tag = 'smem constant byte address 0x4 - core index']
  #allocation1 [shape = 'u32[144,128]{1,0:T(1,128)}', space=vmem, size = 0x12000, scoped, tag = 'internal scratch']
  %s0 = inlined_call_operand.hbm [shape: f32[1,4,512], index: 0, kind: input, shape index: {}]
  %s1 = inlined_call_operand.hbm [shape: f32[9,512], index: 1, kind: input, shape index: {}]
  %s2 = inlined_call_operand.hbm [shape: f32[4,37], index: 2, kind: input, shape index: {}]
  %s3 = inlined_call_operand.vmem [shape: f32[4,37], index: 3, kind: input, shape index: {}]
  %s4 = inlined_call_operand.hbm [shape: f32[1,4,512], index: 4, kind: output, shape index: {}]
  %s5 = sld [smem:[#allocation0]]
  $region38: #{tpu_custom_call.1} parent=0
    _
  %s7 = ssub.s32 1, %s5
  %s8 = scalar_select 0, %s7, %s5
  $region1: #{tpu_custom_call.1} parent=0
    #allocation2 [shape = 'u8[8192]{0}', space=vmem, size = 0x2000, scoped, tag = 'input window, operand 0, single buffered']
    #allocation3 [shape = 's32[1]{0}', space=sflag, size = 0x4, scoped, tag = 'scoped memory for tpu_custom_call.1']
    #allocation4 [shape = 's32[1]{0}', space=sflag, size = 0x4, scoped, tag = 'scoped memory for tpu_custom_call.1']
    #allocation5 [shape = 'u8[32768]{0}', space=vmem, size = 0x8000, scoped, tag = 'input window, operand 1, single buffered']
    #allocation6 [shape = 's32[1]{0}', space=sflag, size = 0x4, scoped, tag = 'scoped memory for tpu_custom_call.1']
    #allocation7 [shape = 'u8[2048]{0}', space=vmem, size = 0x800, scoped, tag = 'input window, operand 2, single buffered']
    #allocation8 [shape = 'u8[8192]{0}', space=vmem, size = 0x2000, scoped, tag = 'output window, operand 0, single buffered']
    %9 = vsyncpa [#allocation3], 0
    %10 = vsyncpa [#allocation6], 0
    %11 = vsyncpa [#allocation4], 0
    // Predicated region
    $region2: #{tpu_custom_call.1} parent=1 // pred_check
      _
    $region3: #{tpu_custom_call.1} parent=1 // pred_check_branch
      %13 = sbr.rel (0) target = $region5
    $region4: #{tpu_custom_call.1} parent=1 // pred_region
      %s15 = ssub.s32 256, 256
      %16 = vsyncadd [#allocation3], %s15
      %s18 = sshll.u32 [#allocation2], 4
      %s19 = int_to_ptr.vmem [resolvable:$true] %s18
      %21 = dma.hbm_to_vmem [thread:$0]  %s0, 256, %s19, [#allocation3]
    $region5: #{tpu_custom_call.1} parent=1 // pred_fallthru
      _
    // Predicated region
    $region6: #{tpu_custom_call.1} parent=1 // pred_check
      _
    $region7: #{tpu_custom_call.1} parent=1 // pred_check_branch
      %23 = sbr.rel (0) target = $region9
    $region8: #{tpu_custom_call.1} parent=1 // pred_region
      %s25 = ssub.s32 1024, 1024
      %26 = vsyncadd [#allocation6], %s25
      %s27 = sshll.u32 [#allocation5], 4
      %s28 = int_to_ptr.vmem [resolvable:$true] %s27
      %33 = dma.hbm_to_vmem [thread:$0]  %s1, 1024, %s28, [#allocation6], 512, 512, 32
    $region9: #{tpu_custom_call.1} parent=1 // pred_fallthru
      _
    // Predicated region
    $region10: #{tpu_custom_call.1} parent=1 // pred_check
      _
    $region11: #{tpu_custom_call.1} parent=1 // pred_check_branch
      %35 = sbr.rel (0) target = $region13
    $region12: #{tpu_custom_call.1} parent=1 // pred_region
      %s37 = ssub.s32 64, 64
      %38 = vsyncadd [#allocation6], %s37
      %s40 = sshll.u32 [#allocation7], 4
      %s41 = int_to_ptr.vmem [resolvable:$true] %s40
      %43 = dma.hbm_to_vmem [thread:$0]  %s2, 64, %s41, [#allocation6]
    $region13: #{tpu_custom_call.1} parent=1 // pred_fallthru
      _
    // Predicated region
    $region14: #{tpu_custom_call.1} parent=1 // pred_check
      _
    $region15: #{tpu_custom_call.1} parent=1 // pred_check_branch
      %45 = sbr.rel (0) target = $region17
    $region16: #{tpu_custom_call.1} parent=1 // pred_region
      _
    $region17: #{tpu_custom_call.1} parent=1 // pred_fallthru
      _
    // Predicated region
    $region18: #{tpu_custom_call.1} parent=1 // pred_check
      _
    $region19: #{tpu_custom_call.1} parent=1 // pred_check_branch
      %47 = sbr.rel (0) target = $region21
    $region20: #{tpu_custom_call.1} parent=1 // pred_region
      %48 = dma.done [#allocation3], 256
    $region21: #{tpu_custom_call.1} parent=1 // pred_fallthru
      _
    // Predicated region
    $region22: #{tpu_custom_call.1} parent=1 // pred_check
      _
    $region23: #{tpu_custom_call.1} parent=1 // pred_check_branch
      %50 = sbr.rel (0) target = $region25
    $region24: #{tpu_custom_call.1} parent=1 // pred_region
      %51 = dma.done [#allocation6], 1024
    $region25: #{tpu_custom_call.1} parent=1 // pred_fallthru
      _
    // Predicated region
    $region26: #{tpu_custom_call.1} parent=1 // pred_check
      _
    $region27: #{tpu_custom_call.1} parent=1 // pred_check_branch
      %53 = sbr.rel (0) target = $region29
    $region28: #{tpu_custom_call.1} parent=1 // pred_region
      %54 = dma.done [#allocation6], 64
    $region29: #{tpu_custom_call.1} parent=1 // pred_fallthru
      _
    %v55 = vld [vmem:[#allocation2] sm:$0xff]
    %v56 = vld [vmem:[#allocation2 + $0x8] sm:$0xff]
    %v57 = vld [vmem:[#allocation7] sm:$0xf]
    %v60 = vcombine.high %v55, %v55
    %v61 = vcombine.high %v56, %v56
    %64 = vrot.lane.b32.xlu0 %v55, 17
    %v65 = vpop.permute.xlu0 %64
    %66 = vrot.lane.b32.xlu0 %v60, 17
    %v67 = vpop.permute.xlu0 %66
    %68 = vrot.lane.b32.xlu0 %v56, 17
    %v69 = vpop.permute.xlu0 %68
    %70 = vrot.lane.b32.xlu0 %v61, 17
    %v71 = vpop.permute.xlu0 %70
    %v72 = vlaneseq
    %v73 = vand.u32 %v72, 127
    %vm74 = vcmp.lt.s32.totalorder %v73, 17
    %v75 = vsel %vm74, %v69, %v71
    %v76 = vsel %vm74, %v67, %v69
    %v77 = vsel %vm74, %v65, %v67
    %v78 = vsel %vm74, %v71, %v65
    %v79 = vld [vmem:[#allocation5] ss:$8 sm:$0xf]
    %v81 = vlaneseq
    %v82 = vshrl.u32 %v81, 7
    %v83 = vsub.s32 0, %v82
    %v84 = vrot.slane %v79, %v83
    %v85 = vlaneseq
    %v86 = vshrl.u32 %v85, 7
    %v87 = vsub.s32 1, %v86
    %v88 = vrot.slane %v79, %v87
    %v89 = vlaneseq
    %v90 = vshrl.u32 %v89, 7
    %v91 = vsub.s32 2, %v90
    %v92 = vrot.slane %v79, %v91
    %v93 = vlaneseq
    %v94 = vshrl.u32 %v93, 7
    %v95 = vsub.s32 3, %v94
    %v96 = vrot.slane %v79, %v95
    %v101 = vmul.f32 %v78, %v84
    %v102 = vmul.f32 %v77, %v88
    %v103 = vmul.f32 %v76, %v92
    %v104 = vmul.f32 %v75, %v96
    %105 = vrot.lane.b32.xlu0 %v55, 16
    %v106 = vpop.permute.xlu0 %105
    %107 = vrot.lane.b32.xlu0 %v60, 16
    %v108 = vpop.permute.xlu0 %107
    %109 = vrot.lane.b32.xlu0 %v56, 16
    %v110 = vpop.permute.xlu0 %109
    %111 = vrot.lane.b32.xlu0 %v61, 16
    %v112 = vpop.permute.xlu0 %111
    %vm113 = vcmp.lt.s32.totalorder %v73, 16
    %v114 = vsel %vm113, %v110, %v112
    %v115 = vsel %vm113, %v108, %v110
    %v116 = vsel %vm113, %v106, %v108
    %v117 = vsel %vm113, %v112, %v106
    %s118 = scalar_lea.vmem [#allocation5], 1
    %v119 = vld [vmem:[%s118] ss:$8 sm:$0xf]
    %v121 = vlaneseq
    %v122 = vshrl.u32 %v121, 7
    %v123 = vsub.s32 0, %v122
    %v124 = vrot.slane %v119, %v123
    %v125 = vlaneseq
    %v126 = vshrl.u32 %v125, 7
    %v127 = vsub.s32 1, %v126
    %v128 = vrot.slane %v119, %v127
    %v129 = vlaneseq
    %v130 = vshrl.u32 %v129, 7
    %v131 = vsub.s32 2, %v130
    %v132 = vrot.slane %v119, %v131
    %v133 = vlaneseq
    %v134 = vshrl.u32 %v133, 7
    %v135 = vsub.s32 3, %v134
    %v136 = vrot.slane %v119, %v135
    %v141 = vmul.f32 %v117, %v124
    %v142 = vmul.f32 %v116, %v128
    %v143 = vmul.f32 %v115, %v132
    %v144 = vmul.f32 %v114, %v136
    %145 = vrot.lane.b32.xlu0 %v55, 15
    %v146 = vpop.permute.xlu0 %145
    %147 = vrot.lane.b32.xlu0 %v60, 15
    %v148 = vpop.permute.xlu0 %147
    %149 = vrot.lane.b32.xlu0 %v56, 15
    %v150 = vpop.permute.xlu0 %149
    %151 = vrot.lane.b32.xlu0 %v61, 15
    %v152 = vpop.permute.xlu0 %151
    %vm153 = vcmp.lt.s32.totalorder %v73, 15
    %v154 = vsel %vm153, %v150, %v152
    %v155 = vsel %vm153, %v148, %v150
    %v156 = vsel %vm153, %v146, %v148
    %v157 = vsel %vm153, %v152, %v146
    %s158 = scalar_lea.vmem [#allocation5], 2
    %v159 = vld [vmem:[%s158] ss:$8 sm:$0xf]
    %v161 = vlaneseq
    %v162 = vshrl.u32 %v161, 7
    %v163 = vsub.s32 0, %v162
    %v164 = vrot.slane %v159, %v163
    %v165 = vlaneseq
    %v166 = vshrl.u32 %v165, 7
    %v167 = vsub.s32 1, %v166
    %v168 = vrot.slane %v159, %v167
    %v169 = vlaneseq
    %v170 = vshrl.u32 %v169, 7
    %v171 = vsub.s32 2, %v170
    %v172 = vrot.slane %v159, %v171
    %v173 = vlaneseq
    %v174 = vshrl.u32 %v173, 7
    %v175 = vsub.s32 3, %v174
    %v176 = vrot.slane %v159, %v175
    %v181 = vmul.f32 %v157, %v164
    %v182 = vmul.f32 %v156, %v168
    %v183 = vmul.f32 %v155, %v172
    %v184 = vmul.f32 %v154, %v176
    %185 = vrot.lane.b32.xlu0 %v55, 1
    %v186 = vpop.permute.xlu0 %185
    %187 = vrot.lane.b32.xlu0 %v60, 1
    %v188 = vpop.permute.xlu0 %187
    %189 = vrot.lane.b32.xlu0 %v56, 1
    %v190 = vpop.permute.xlu0 %189
    %191 = vrot.lane.b32.xlu0 %v61, 1
    %v192 = vpop.permute.xlu0 %191
    %vm193 = vcmp.lt.s32.totalorder %v73, 1
    %v194 = vsel %vm193, %v190, %v192
    %v195 = vsel %vm193, %v188, %v190
    %v196 = vsel %vm193, %v186, %v188
    %v197 = vsel %vm193, %v192, %v186
    %s198 = scalar_lea.vmem [#allocation5], 3
    %v199 = vld [vmem:[%s198] ss:$8 sm:$0xf]
    %v201 = vlaneseq
    %v202 = vshrl.u32 %v201, 7
    %v203 = vsub.s32 0, %v202
    %v204 = vrot.slane %v199, %v203
    %v205 = vlaneseq
    %v206 = vshrl.u32 %v205, 7
    %v207 = vsub.s32 1, %v206
    %v208 = vrot.slane %v199, %v207
    %v209 = vlaneseq
    %v210 = vshrl.u32 %v209, 7
    %v211 = vsub.s32 2, %v210
    %v212 = vrot.slane %v199, %v211
    %v213 = vlaneseq
    %v214 = vshrl.u32 %v213, 7
    %v215 = vsub.s32 3, %v214
    %v216 = vrot.slane %v199, %v215
    %v221 = vmul.f32 %v197, %v204
    %v222 = vmul.f32 %v196, %v208
    %v223 = vmul.f32 %v195, %v212
    %v224 = vmul.f32 %v194, %v216
    %225 = vrot.lane.b32.xlu0 %v55, 127
    %v226 = vpop.permute.xlu0 %225
    %227 = vrot.lane.b32.xlu0 %v60, 127
    %v228 = vpop.permute.xlu0 %227
    %229 = vrot.lane.b32.xlu0 %v56, 127
    %v230 = vpop.permute.xlu0 %229
    %231 = vrot.lane.b32.xlu0 %v61, 127
    %v232 = vpop.permute.xlu0 %231
    %vm233 = vcmp.lt.s32.totalorder %v73, 127
    %v234 = vsel %vm233, %v230, %v232
    %v235 = vsel %vm233, %v228, %v230
    %v236 = vsel %vm233, %v226, %v228
    %v237 = vsel %vm233, %v232, %v226
    %s238 = scalar_lea.vmem [#allocation5], 5
    %v239 = vld [vmem:[%s238] ss:$8 sm:$0xf]
    %v241 = vlaneseq
    %v242 = vshrl.u32 %v241, 7
    %v243 = vsub.s32 0, %v242
    %v244 = vrot.slane %v239, %v243
    %v245 = vlaneseq
    %v246 = vshrl.u32 %v245, 7
    %v247 = vsub.s32 1, %v246
    %v248 = vrot.slane %v239, %v247
    %v249 = vlaneseq
    %v250 = vshrl.u32 %v249, 7
    %v251 = vsub.s32 2, %v250
    %v252 = vrot.slane %v239, %v251
    %v253 = vlaneseq
    %v254 = vshrl.u32 %v253, 7
    %v255 = vsub.s32 3, %v254
    %v256 = vrot.slane %v239, %v255
    %v261 = vmul.f32 %v236, %v244
    %v262 = vmul.f32 %v235, %v248
    %v263 = vmul.f32 %v234, %v252
    %v264 = vmul.f32 %v237, %v256
    %265 = vrot.lane.b32.xlu0 %v55, 113
    %v266 = vpop.permute.xlu0 %265
    %267 = vrot.lane.b32.xlu0 %v60, 113
    %v268 = vpop.permute.xlu0 %267
    %269 = vrot.lane.b32.xlu0 %v56, 113
    %v270 = vpop.permute.xlu0 %269
    %271 = vrot.lane.b32.xlu0 %v61, 113
    %v272 = vpop.permute.xlu0 %271
    %vm273 = vcmp.lt.s32.totalorder %v73, 113
    %v274 = vsel %vm273, %v270, %v272
    %v275 = vsel %vm273, %v268, %v270
    %v276 = vsel %vm273, %v266, %v268
    %v277 = vsel %vm273, %v272, %v266
    %s278 = scalar_lea.vmem [#allocation5], 6
    %v279 = vld [vmem:[%s278] ss:$8 sm:$0xf]
    %v281 = vlaneseq
    %v282 = vshrl.u32 %v281, 7
    %v283 = vsub.s32 0, %v282
    %v284 = vrot.slane %v279, %v283
    %v285 = vlaneseq
    %v286 = vshrl.u32 %v285, 7
    %v287 = vsub.s32 1, %v286
    %v288 = vrot.slane %v279, %v287
    %v289 = vlaneseq
    %v290 = vshrl.u32 %v289, 7
    %v291 = vsub.s32 2, %v290
    %v292 = vrot.slane %v279, %v291
    %v293 = vlaneseq
    %v294 = vshrl.u32 %v293, 7
    %v295 = vsub.s32 3, %v294
    %v296 = vrot.slane %v279, %v295
    %v301 = vmul.f32 %v276, %v284
    %v302 = vmul.f32 %v275, %v288
    %v303 = vmul.f32 %v274, %v292
    %v304 = vmul.f32 %v277, %v296
    %305 = vrot.lane.b32.xlu0 %v55, 112
    %v306 = vpop.permute.xlu0 %305
    %307 = vrot.lane.b32.xlu0 %v60, 112
    %v308 = vpop.permute.xlu0 %307
    %309 = vrot.lane.b32.xlu0 %v56, 112
    %v310 = vpop.permute.xlu0 %309
    %311 = vrot.lane.b32.xlu0 %v61, 112
    %v312 = vpop.permute.xlu0 %311
    %vm313 = vcmp.lt.s32.totalorder %v73, 112
    %v314 = vsel %vm313, %v310, %v312
    %v315 = vsel %vm313, %v308, %v310
    %v316 = vsel %vm313, %v306, %v308
    %v317 = vsel %vm313, %v312, %v306
    %s318 = scalar_lea.vmem [#allocation5], 7
    %v319 = vld [vmem:[%s318] ss:$8 sm:$0xf]
    %v321 = vlaneseq
    %v322 = vshrl.u32 %v321, 7
    %v323 = vsub.s32 0, %v322
    %v324 = vrot.slane %v319, %v323
    %v325 = vlaneseq
    %v326 = vshrl.u32 %v325, 7
    %v327 = vsub.s32 1, %v326
    %v328 = vrot.slane %v319, %v327
    %v329 = vlaneseq
    %v330 = vshrl.u32 %v329, 7
    %v331 = vsub.s32 2, %v330
    %v332 = vrot.slane %v319, %v331
    %v333 = vlaneseq
    %v334 = vshrl.u32 %v333, 7
    %v335 = vsub.s32 3, %v334
    %v336 = vrot.slane %v319, %v335
    %v341 = vmul.f32 %v316, %v324
    %v342 = vmul.f32 %v315, %v328
    %v343 = vmul.f32 %v314, %v332
    %v344 = vmul.f32 %v317, %v336
    %345 = vrot.lane.b32.xlu0 %v55, 111
    %v346 = vpop.permute.xlu0 %345
    %347 = vrot.lane.b32.xlu0 %v60, 111
    %v348 = vpop.permute.xlu0 %347
    %349 = vrot.lane.b32.xlu0 %v56, 111
    %v350 = vpop.permute.xlu0 %349
    %351 = vrot.lane.b32.xlu0 %v61, 111
    %v352 = vpop.permute.xlu0 %351
    %vm353 = vcmp.lt.s32.totalorder %v73, 111
    %v354 = vsel %vm353, %v350, %v352
    %v355 = vsel %vm353, %v348, %v350
    %v356 = vsel %vm353, %v346, %v348
    %v357 = vsel %vm353, %v352, %v346
    %s358 = scalar_lea.vmem [#allocation5], 32
    %v359 = vld [vmem:[%s358] ss:$8 sm:$0xf]
    %v361 = vlaneseq
    %v362 = vshrl.u32 %v361, 7
    %v363 = vsub.s32 0, %v362
    %v364 = vrot.slane %v359, %v363
    %v365 = vlaneseq
    %v366 = vshrl.u32 %v365, 7
    %v367 = vsub.s32 1, %v366
    %v368 = vrot.slane %v359, %v367
    %v369 = vlaneseq
    %v370 = vshrl.u32 %v369, 7
    %v371 = vsub.s32 2, %v370
    %v372 = vrot.slane %v359, %v371
    %v373 = vlaneseq
    %v374 = vshrl.u32 %v373, 7
    %v375 = vsub.s32 3, %v374
    %v376 = vrot.slane %v359, %v375
    %v381 = vmul.f32 %v356, %v364
    %v382 = vmul.f32 %v355, %v368
    %v383 = vmul.f32 %v354, %v372
    %v384 = vmul.f32 %v357, %v376
    %v389 = vrot.slane %v141, 4
    %v390 = vrot.slane %v142, 4
    %v391 = vrot.slane %v143, 4
    %v392 = vrot.slane %v144, 4
    %v401 = vrot.slane %v221, 4
    %v402 = vrot.slane %v222, 4
    %v403 = vrot.slane %v223, 4
    %v404 = vrot.slane %v224, 4
    %v413 = vrot.slane %v261, 4
    %v414 = vrot.slane %v262, 4
    %v415 = vrot.slane %v263, 4
    %v416 = vrot.slane %v264, 4
    %v425 = vrot.slane %v341, 4
    %v426 = vrot.slane %v342, 4
    %v427 = vrot.slane %v343, 4
    %v428 = vrot.slane %v344, 4
    %vm433 = vcmask 1043456
    %v434 = vsel %vm433, %v101, %v389
    %v435 = vsel %vm433, %v102, %v390
    %v436 = vsel %vm433, %v103, %v391
    %v437 = vsel %vm433, %v104, %v392
    %v438 = vsel %vm433, %v181, %v401
    %v439 = vsel %vm433, %v182, %v402
    %v440 = vsel %vm433, %v183, %v403
    %v441 = vsel %vm433, %v184, %v404
    %v442 = vsel %vm433, %v55, %v413
    %v443 = vsel %vm433, %v60, %v414
    %v444 = vsel %vm433, %v56, %v415
    %v445 = vsel %vm433, %v61, %v416
    %v446 = vsel %vm433, %v301, %v425
    %v447 = vsel %vm433, %v302, %v426
    %v448 = vsel %vm433, %v303, %v427
    %v449 = vsel %vm433, %v304, %v428
    %v450 = vsel %vm433, %v381, 1.0
    %v451 = vsel %vm433, %v382, 1.0
    %v452 = vsel %vm433, %v383, 1.0
    %v453 = vsel %vm433, %v384, 1.0
    %vm454 = vcmask 302080
    %v456 = vsel %vm454, %v57, 0
    %vm458 = vcmask 1044480
    %v460 = vsel %vm458, %v450, 0
    %v463 = vsel %vm458, %v451, 0
    %v466 = vsel %vm458, %v452, 0
    %v469 = vsel %vm458, %v453, 0
    %471 = vmatprep.subr.mxu0 0.0
    %472 = vmatpush1.msra.mxu0 0.0
    %473 = vmatprep.subr.mxu0 0.0
    %474 = vmatpush1.msra.mxu0 0.0
    %475 = vmatprep.subr.mxu0 0.0
    %476 = vmatpush1.msra.mxu0 0.0
    %477 = vmatprep.subr.mxu0 0.0
    %478 = vmatpush1.msra.mxu0 0.0
    %479 = vmatprep.subr.mxu0 0.0
    %480 = vmatpush1.msra.mxu0 0.0
    %481 = vmatprep.subr.mxu0 0.0
    %482 = vmatpush1.msra.mxu0 0.0
    %483 = vmatprep.subr.mxu0 0.0
    %484 = vmatpush1.msra.mxu0 0.0
    %485 = vmatprep.subr.mxu0 0.0
    %486 = vmatpush1.msra.mxu0 0.0
    %487 = vmatprep.subr.mxu0 0.0
    %488 = vmatpush1.msra.mxu0 0.0
    %489 = vmatprep.subr.mxu0 0.0
    %490 = vmatpush1.msra.mxu0 0.0
    %491 = vmatprep.subr.mxu0 0.0
    %492 = vmatpush1.msra.mxu0 0.0
    %493 = vmatprep.subr.mxu0 %v463
    %494 = vmatpush1.msra.mxu0 %v460
    %495 = vmatprep.subr.mxu0 %v447
    %496 = vmatpush1.msra.mxu0 %v446
    %497 = vmatprep.subr.mxu0 %v443
    %498 = vmatpush1.msra.mxu0 %v442
    %499 = vmatprep.subr.mxu0 %v439
    %500 = vmatpush1.msra.mxu0 %v438
    %501 = vmatprep.subr.mxu0 %v435
    %502 = vmatpush1.msra.mxu0 %v434
    %503 = vmatprep.subr.mxu0 0.0
    %504 = vmatpush2.msra.mxu0 0.0
    %505 = vmatprep.subr.mxu0 0.0
    %506 = vmatpush2.msra.mxu0 0.0
    %507 = vmatprep.subr.mxu0 0.0
    %508 = vmatpush2.msra.mxu0 0.0
    %509 = vmatprep.subr.mxu0 0.0
    %510 = vmatpush2.msra.mxu0 0.0
    %511 = vmatprep.subr.mxu0 0.0
    %512 = vmatpush2.msra.mxu0 0.0
    %513 = vmatprep.subr.mxu0 0.0
    %514 = vmatpush2.msra.mxu0 0.0
    %515 = vmatprep.subr.mxu0 0.0
    %516 = vmatpush2.msra.mxu0 0.0
    %517 = vmatprep.subr.mxu0 0.0
    %518 = vmatpush2.msra.mxu0 0.0
    %519 = vmatprep.subr.mxu0 0.0
    %520 = vmatpush2.msra.mxu0 0.0
    %521 = vmatprep.subr.mxu0 0.0
    %522 = vmatpush2.msra.mxu0 0.0
    %523 = vmatprep.subr.mxu0 0.0
    %524 = vmatpush2.msra.mxu0 0.0
    %525 = vmatprep.subr.mxu0 0.0
    %526 = vmatpush2.msra.mxu0 0.0
    %527 = vmatprep.subr.mxu0 0.0
    %528 = vmatpush2.msra.mxu0 0.0
    %529 = vmatprep.subr.mxu0 0.0
    %530 = vmatpush2.msra.mxu0 0.0
    %531 = vmatprep.subr.mxu0 0.0
    %532 = vmatpush2.msra.mxu0 0.0
    %533 = vmatprep.subr.mxu0 0.0
    %534 = vmatpush2.msra.mxu0 0.0
    %535 = vmatprep.mubr.f32.mxu0 0.0
    %536 = vmatmul.mubr.f32.gmra.mxu0 %v456
    %v537 = vpop.f32.mrf.mxu0
    %v538 = vadd.f32 0.0, %v537
    %v539 = vpop.f32.mrf.mxu0
    %v540 = vadd.f32 0.0, %v539
    %541 = vdwg.mxu0
    %542 = vmatprep.subr.mxu0 0.0
    %543 = vmatpush1.msra.mxu0 0.0
    %544 = vmatprep.subr.mxu0 0.0
    %545 = vmatpush1.msra.mxu0 0.0
    %546 = vmatprep.subr.mxu0 0.0
    %547 = vmatpush1.msra.mxu0 0.0
    %548 = vmatprep.subr.mxu0 0.0
    %549 = vmatpush1.msra.mxu0 0.0
    %550 = vmatprep.subr.mxu0 0.0
    %551 = vmatpush1.msra.mxu0 0.0
    %552 = vmatprep.subr.mxu0 0.0
    %553 = vmatpush1.msra.mxu0 0.0
    %554 = vmatprep.subr.mxu0 0.0
    %555 = vmatpush1.msra.mxu0 0.0
    %556 = vmatprep.subr.mxu0 0.0
    %557 = vmatpush1.msra.mxu0 0.0
    %558 = vmatprep.subr.mxu0 0.0
    %559 = vmatpush1.msra.mxu0 0.0
    %560 = vmatprep.subr.mxu0 0.0
    %561 = vmatpush1.msra.mxu0 0.0
    %562 = vmatprep.subr.mxu0 0.0
    %563 = vmatpush1.msra.mxu0 0.0
    %564 = vmatprep.subr.mxu0 %v469
    %565 = vmatpush1.msra.mxu0 %v466
    %566 = vmatprep.subr.mxu0 %v449
    %567 = vmatpush1.msra.mxu0 %v448
    %568 = vmatprep.subr.mxu0 %v445
    %569 = vmatpush1.msra.mxu0 %v444
    %570 = vmatprep.subr.mxu0 %v441
    %571 = vmatpush1.msra.mxu0 %v440
    %572 = vmatprep.subr.mxu0 %v437
    %573 = vmatpush1.msra.mxu0 %v436
    %574 = vmatprep.subr.mxu0 0.0
    %575 = vmatpush2.msra.mxu0 0.0
    %576 = vmatprep.subr.mxu0 0.0
    %577 = vmatpush2.msra.mxu0 0.0
    %578 = vmatprep.subr.mxu0 0.0
    %579 = vmatpush2.msra.mxu0 0.0
    %580 = vmatprep.subr.mxu0 0.0
    %581 = vmatpush2.msra.mxu0 0.0
    %582 = vmatprep.subr.mxu0 0.0
    %583 = vmatpush2.msra.mxu0 0.0
    %584 = vmatprep.subr.mxu0 0.0
    %585 = vmatpush2.msra.mxu0 0.0
    %586 = vmatprep.subr.mxu0 0.0
    %587 = vmatpush2.msra.mxu0 0.0
    %588 = vmatprep.subr.mxu0 0.0
    %589 = vmatpush2.msra.mxu0 0.0
    %590 = vmatprep.subr.mxu0 0.0
    %591 = vmatpush2.msra.mxu0 0.0
    %592 = vmatprep.subr.mxu0 0.0
    %593 = vmatpush2.msra.mxu0 0.0
    %594 = vmatprep.subr.mxu0 0.0
    %595 = vmatpush2.msra.mxu0 0.0
    %596 = vmatprep.subr.mxu0 0.0
    %597 = vmatpush2.msra.mxu0 0.0
    %598 = vmatprep.subr.mxu0 0.0
    %599 = vmatpush2.msra.mxu0 0.0
    %600 = vmatprep.subr.mxu0 0.0
    %601 = vmatpush2.msra.mxu0 0.0
    %602 = vmatprep.subr.mxu0 0.0
    %603 = vmatpush2.msra.mxu0 0.0
    %604 = vmatprep.subr.mxu0 0.0
    %605 = vmatpush2.msra.mxu0 0.0
    %606 = vmatprep.mubr.f32.mxu0 0.0
    %607 = vmatmul.mubr.f32.gmra.mxu0 %v456
    %v608 = vpop.f32.mrf.mxu0
    %v609 = vadd.f32 0.0, %v608
    %v610 = vpop.f32.mrf.mxu0
    %v611 = vadd.f32 0.0, %v610
    %612 = vdwg.mxu0
    %v613 = vmax.f32 %v538, 0.0
    %v614 = vmax.f32 %v540, 0.0
    %v615 = vmax.f32 %v609, 0.0
    %v616 = vmax.f32 %v611, 0.0
    %v617 = vld [vmem:[%s3] sm:$0xf]
    %618 = vrot.lane.b32.xlu0 %v613, 17
    %v619 = vpop.permute.xlu0 %618
    %620 = vrot.lane.b32.xlu0 %v614, 17
    %v621 = vpop.permute.xlu0 %620
    %622 = vrot.lane.b32.xlu0 %v615, 17
    %v623 = vpop.permute.xlu0 %622
    %624 = vrot.lane.b32.xlu0 %v616, 17
    %v625 = vpop.permute.xlu0 %624
    %v626 = vsel %vm74, %v623, %v625
    %v627 = vsel %vm74, %v621, %v623
    %v628 = vsel %vm74, %v619, %v621
    %v629 = vsel %vm74, %v625, %v619
    %v630 = vmul.f32 %v629, %v84
    %v631 = vmul.f32 %v628, %v88
    %v632 = vmul.f32 %v627, %v92
    %v633 = vmul.f32 %v626, %v96
    %634 = vrot.lane.b32.xlu0 %v613, 16
    %v635 = vpop.permute.xlu0 %634
    %636 = vrot.lane.b32.xlu0 %v614, 16
    %v637 = vpop.permute.xlu0 %636
    %638 = vrot.lane.b32.xlu0 %v615, 16
    %v639 = vpop.permute.xlu0 %638
    %640 = vrot.lane.b32.xlu0 %v616, 16
    %v641 = vpop.permute.xlu0 %640
    %v642 = vsel %vm113, %v639, %v641
    %v643 = vsel %vm113, %v637, %v639
    %v644 = vsel %vm113, %v635, %v637
    %v645 = vsel %vm113, %v641, %v635
    %v646 = vmul.f32 %v645, %v124
    %v647 = vmul.f32 %v644, %v128
    %v648 = vmul.f32 %v643, %v132
    %v649 = vmul.f32 %v642, %v136
    %650 = vrot.lane.b32.xlu0 %v613, 15
    %v651 = vpop.permute.xlu0 %650
    %652 = vrot.lane.b32.xlu0 %v614, 15
    %v653 = vpop.permute.xlu0 %652
    %654 = vrot.lane.b32.xlu0 %v615, 15
    %v655 = vpop.permute.xlu0 %654
    %656 = vrot.lane.b32.xlu0 %v616, 15
    %v657 = vpop.permute.xlu0 %656
    %v658 = vsel %vm153, %v655, %v657
    %v659 = vsel %vm153, %v653, %v655
    %v660 = vsel %vm153, %v651, %v653
    %v661 = vsel %vm153, %v657, %v651
    %v662 = vmul.f32 %v661, %v164
    %v663 = vmul.f32 %v660, %v168
    %v664 = vmul.f32 %v659, %v172
    %v665 = vmul.f32 %v658, %v176
    %666 = vrot.lane.b32.xlu0 %v613, 1
    %v667 = vpop.permute.xlu0 %666
    %668 = vrot.lane.b32.xlu0 %v614, 1
    %v669 = vpop.permute.xlu0 %668
    %670 = vrot.lane.b32.xlu0 %v615, 1
    %v671 = vpop.permute.xlu0 %670
    %672 = vrot.lane.b32.xlu0 %v616, 1
    %v673 = vpop.permute.xlu0 %672
    %v674 = vsel %vm193, %v671, %v673
    %v675 = vsel %vm193, %v669, %v671
    %v676 = vsel %vm193, %v667, %v669
    %v677 = vsel %vm193, %v673, %v667
    %v678 = vmul.f32 %v677, %v204
    %v679 = vmul.f32 %v676, %v208
    %v680 = vmul.f32 %v675, %v212
    %v681 = vmul.f32 %v674, %v216
    %682 = vrot.lane.b32.xlu0 %v613, 127
    %v683 = vpop.permute.xlu0 %682
    %684 = vrot.lane.b32.xlu0 %v614, 127
    %v685 = vpop.permute.xlu0 %684
    %686 = vrot.lane.b32.xlu0 %v615, 127
    %v687 = vpop.permute.xlu0 %686
    %688 = vrot.lane.b32.xlu0 %v616, 127
    %v689 = vpop.permute.xlu0 %688
    %v690 = vsel %vm233, %v687, %v689
    %v691 = vsel %vm233, %v685, %v687
    %v692 = vsel %vm233, %v683, %v685
    %v693 = vsel %vm233, %v689, %v683
    %v694 = vmul.f32 %v692, %v244
    %v695 = vmul.f32 %v691, %v248
    %v696 = vmul.f32 %v690, %v252
    %v697 = vmul.f32 %v693, %v256
    %698 = vrot.lane.b32.xlu0 %v613, 113
    %v699 = vpop.permute.xlu0 %698
    %700 = vrot.lane.b32.xlu0 %v614, 113
    %v701 = vpop.permute.xlu0 %700
    %702 = vrot.lane.b32.xlu0 %v615, 113
    %v703 = vpop.permute.xlu0 %702
    %704 = vrot.lane.b32.xlu0 %v616, 113
    %v705 = vpop.permute.xlu0 %704
    %v706 = vsel %vm273, %v703, %v705
    %v707 = vsel %vm273, %v701, %v703
    %v708 = vsel %vm273, %v699, %v701
    %v709 = vsel %vm273, %v705, %v699
    %v710 = vmul.f32 %v708, %v284
    %v711 = vmul.f32 %v707, %v288
    %v712 = vmul.f32 %v706, %v292
    %v713 = vmul.f32 %v709, %v296
    %714 = vrot.lane.b32.xlu0 %v613, 112
    %v715 = vpop.permute.xlu0 %714
    %716 = vrot.lane.b32.xlu0 %v614, 112
    %v717 = vpop.permute.xlu0 %716
    %718 = vrot.lane.b32.xlu0 %v615, 112
    %v719 = vpop.permute.xlu0 %718
    %720 = vrot.lane.b32.xlu0 %v616, 112
    %v721 = vpop.permute.xlu0 %720
    %v722 = vsel %vm313, %v719, %v721
    %v723 = vsel %vm313, %v717, %v719
    %v724 = vsel %vm313, %v715, %v717
    %v725 = vsel %vm313, %v721, %v715
    %v726 = vmul.f32 %v724, %v324
    %v727 = vmul.f32 %v723, %v328
    %v728 = vmul.f32 %v722, %v332
    %v729 = vmul.f32 %v725, %v336
    %730 = vrot.lane.b32.xlu0 %v613, 111
    %v731 = vpop.permute.xlu0 %730
    %732 = vrot.lane.b32.xlu0 %v614, 111
    %v733 = vpop.permute.xlu0 %732
    %734 = vrot.lane.b32.xlu0 %v615, 111
    %v735 = vpop.permute.xlu0 %734
    %736 = vrot.lane.b32.xlu0 %v616, 111
    %v737 = vpop.permute.xlu0 %736
    %v738 = vsel %vm353, %v735, %v737
    %v739 = vsel %vm353, %v733, %v735
    %v740 = vsel %vm353, %v731, %v733
    %v741 = vsel %vm353, %v737, %v731
    %v742 = vmul.f32 %v740, %v364
    %v743 = vmul.f32 %v739, %v368
    %v744 = vmul.f32 %v738, %v372
    %v745 = vmul.f32 %v741, %v376
    %v750 = vrot.slane %v646, 4
    %v751 = vrot.slane %v647, 4
    %v752 = vrot.slane %v648, 4
    %v753 = vrot.slane %v649, 4
    %v762 = vrot.slane %v678, 4
    %v763 = vrot.slane %v679, 4
    %v764 = vrot.slane %v680, 4
    %v765 = vrot.slane %v681, 4
    %v774 = vrot.slane %v694, 4
    %v775 = vrot.slane %v695, 4
    %v776 = vrot.slane %v696, 4
    %v777 = vrot.slane %v697, 4
    %v786 = vrot.slane %v726, 4
    %v787 = vrot.slane %v727, 4
    %v788 = vrot.slane %v728, 4
    %v789 = vrot.slane %v729, 4
    %v794 = vsel %vm433, %v630, %v750
    %v795 = vsel %vm433, %v631, %v751
    %v796 = vsel %vm433, %v632, %v752
    %v797 = vsel %vm433, %v633, %v753
    %v798 = vsel %vm433, %v662, %v762
    %v799 = vsel %vm433, %v663, %v763
    %v800 = vsel %vm433, %v664, %v764
    %v801 = vsel %vm433, %v665, %v765
    %v802 = vsel %vm433, %v613, %v774
    %v803 = vsel %vm433, %v614, %v775
    %v804 = vsel %vm433, %v615, %v776
    %v805 = vsel %vm433, %v616, %v777
    %v806 = vsel %vm433, %v710, %v786
    %v807 = vsel %vm433, %v711, %v787
    %v808 = vsel %vm433, %v712, %v788
    %v809 = vsel %vm433, %v713, %v789
    %v810 = vsel %vm433, %v742, 1.0
    %v811 = vsel %vm433, %v743, 1.0
    %v812 = vsel %vm433, %v744, 1.0
    %v813 = vsel %vm433, %v745, 1.0
    %v815 = vsel %vm454, %v617, 0
    %v818 = vsel %vm458, %v810, 0
    %v821 = vsel %vm458, %v811, 0
    %v824 = vsel %vm458, %v812, 0
    %v827 = vsel %vm458, %v813, 0
    %829 = vmatprep.subr.mxu0 0.0
    %830 = vmatpush1.msra.mxu0 0.0
    %831 = vmatprep.subr.mxu0 0.0
    %832 = vmatpush1.msra.mxu0 0.0
    %833 = vmatprep.subr.mxu0 0.0
    %834 = vmatpush1.msra.mxu0 0.0
    %835 = vmatprep.subr.mxu0 0.0
    %836 = vmatpush1.msra.mxu0 0.0
    %837 = vmatprep.subr.mxu0 0.0
    %838 = vmatpush1.msra.mxu0 0.0
    %839 = vmatprep.subr.mxu0 0.0
    %840 = vmatpush1.msra.mxu0 0.0
    %841 = vmatprep.subr.mxu0 0.0
    %842 = vmatpush1.msra.mxu0 0.0
    %843 = vmatprep.subr.mxu0 0.0
    %844 = vmatpush1.msra.mxu0 0.0
    %845 = vmatprep.subr.mxu0 0.0
    %846 = vmatpush1.msra.mxu0 0.0
    %847 = vmatprep.subr.mxu0 0.0
    %848 = vmatpush1.msra.mxu0 0.0
    %849 = vmatprep.subr.mxu0 0.0
    %850 = vmatpush1.msra.mxu0 0.0
    %851 = vmatprep.subr.mxu0 %v821
    %852 = vmatpush1.msra.mxu0 %v818
    %853 = vmatprep.subr.mxu0 %v807
    %854 = vmatpush1.msra.mxu0 %v806
    %855 = vmatprep.subr.mxu0 %v803
    %856 = vmatpush1.msra.mxu0 %v802
    %857 = vmatprep.subr.mxu0 %v799
    %858 = vmatpush1.msra.mxu0 %v798
    %859 = vmatprep.subr.mxu0 %v795
    %860 = vmatpush1.msra.mxu0 %v794
    %861 = vmatprep.subr.mxu0 0.0
    %862 = vmatpush2.msra.mxu0 0.0
    %863 = vmatprep.subr.mxu0 0.0
    %864 = vmatpush2.msra.mxu0 0.0
    %865 = vmatprep.subr.mxu0 0.0
    %866 = vmatpush2.msra.mxu0 0.0
    %867 = vmatprep.subr.mxu0 0.0
    %868 = vmatpush2.msra.mxu0 0.0
    %869 = vmatprep.subr.mxu0 0.0
    %870 = vmatpush2.msra.mxu0 0.0
    %871 = vmatprep.subr.mxu0 0.0
    %872 = vmatpush2.msra.mxu0 0.0
    %873 = vmatprep.subr.mxu0 0.0
    %874 = vmatpush2.msra.mxu0 0.0
    %875 = vmatprep.subr.mxu0 0.0
    %876 = vmatpush2.msra.mxu0 0.0
    %877 = vmatprep.subr.mxu0 0.0
    %878 = vmatpush2.msra.mxu0 0.0
    %879 = vmatprep.subr.mxu0 0.0
    %880 = vmatpush2.msra.mxu0 0.0
    %881 = vmatprep.subr.mxu0 0.0
    %882 = vmatpush2.msra.mxu0 0.0
    %883 = vmatprep.subr.mxu0 0.0
    %884 = vmatpush2.msra.mxu0 0.0
    %885 = vmatprep.subr.mxu0 0.0
    %886 = vmatpush2.msra.mxu0 0.0
    %887 = vmatprep.subr.mxu0 0.0
    %888 = vmatpush2.msra.mxu0 0.0
    %889 = vmatprep.subr.mxu0 0.0
    %890 = vmatpush2.msra.mxu0 0.0
    %891 = vmatprep.subr.mxu0 0.0
    %892 = vmatpush2.msra.mxu0 0.0
    %893 = vmatprep.mubr.f32.mxu0 0.0
    %894 = vmatmul.mubr.f32.gmra.mxu0 %v815
    %v895 = vpop.f32.mrf.mxu0
    %v896 = vadd.f32 0.0, %v895
    %v897 = vpop.f32.mrf.mxu0
    %v898 = vadd.f32 0.0, %v897
    %899 = vdwg.mxu0
    %900 = vmatprep.subr.mxu0 0.0
    %901 = vmatpush1.msra.mxu0 0.0
    %902 = vmatprep.subr.mxu0 0.0
    %903 = vmatpush1.msra.mxu0 0.0
    %904 = vmatprep.subr.mxu0 0.0
    %905 = vmatpush1.msra.mxu0 0.0
    %906 = vmatprep.subr.mxu0 0.0
    %907 = vmatpush1.msra.mxu0 0.0
    %908 = vmatprep.subr.mxu0 0.0
    %909 = vmatpush1.msra.mxu0 0.0
    %910 = vmatprep.subr.mxu0 0.0
    %911 = vmatpush1.msra.mxu0 0.0
    %912 = vmatprep.subr.mxu0 0.0
    %913 = vmatpush1.msra.mxu0 0.0
    %914 = vmatprep.subr.mxu0 0.0
    %915 = vmatpush1.msra.mxu0 0.0
    %916 = vmatprep.subr.mxu0 0.0
    %917 = vmatpush1.msra.mxu0 0.0
    %918 = vmatprep.subr.mxu0 0.0
    %919 = vmatpush1.msra.mxu0 0.0
    %920 = vmatprep.subr.mxu0 0.0
    %921 = vmatpush1.msra.mxu0 0.0
    %922 = vmatprep.subr.mxu0 %v827
    %923 = vmatpush1.msra.mxu0 %v824
    %924 = vmatprep.subr.mxu0 %v809
    %925 = vmatpush1.msra.mxu0 %v808
    %926 = vmatprep.subr.mxu0 %v805
    %927 = vmatpush1.msra.mxu0 %v804
    %928 = vmatprep.subr.mxu0 %v801
    %929 = vmatpush1.msra.mxu0 %v800
    %930 = vmatprep.subr.mxu0 %v797
    %931 = vmatpush1.msra.mxu0 %v796
    %932 = vmatprep.subr.mxu0 0.0
    %933 = vmatpush2.msra.mxu0 0.0
    %934 = vmatprep.subr.mxu0 0.0
    %935 = vmatpush2.msra.mxu0 0.0
    %936 = vmatprep.subr.mxu0 0.0
    %937 = vmatpush2.msra.mxu0 0.0
    %938 = vmatprep.subr.mxu0 0.0
    %939 = vmatpush2.msra.mxu0 0.0
    %940 = vmatprep.subr.mxu0 0.0
    %941 = vmatpush2.msra.mxu0 0.0
    %942 = vmatprep.subr.mxu0 0.0
    %943 = vmatpush2.msra.mxu0 0.0
    %944 = vmatprep.subr.mxu0 0.0
    %945 = vmatpush2.msra.mxu0 0.0
    %946 = vmatprep.subr.mxu0 0.0
    %947 = vmatpush2.msra.mxu0 0.0
    %948 = vmatprep.subr.mxu0 0.0
    %949 = vmatpush2.msra.mxu0 0.0
    %950 = vmatprep.subr.mxu0 0.0
    %951 = vmatpush2.msra.mxu0 0.0
    %952 = vmatprep.subr.mxu0 0.0
    %953 = vmatpush2.msra.mxu0 0.0
    %954 = vmatprep.subr.mxu0 0.0
    %955 = vmatpush2.msra.mxu0 0.0
    %956 = vmatprep.subr.mxu0 0.0
    %957 = vmatpush2.msra.mxu0 0.0
    %958 = vmatprep.subr.mxu0 0.0
    %959 = vmatpush2.msra.mxu0 0.0
    %960 = vmatprep.subr.mxu0 0.0
    %961 = vmatpush2.msra.mxu0 0.0
    %962 = vmatprep.subr.mxu0 0.0
    %963 = vmatpush2.msra.mxu0 0.0
    %964 = vmatprep.mubr.f32.mxu0 0.0
    %965 = vmatmul.mubr.f32.gmra.mxu0 %v815
    %v966 = vpop.f32.mrf.mxu0
    %v967 = vadd.f32 0.0, %v966
    %v968 = vpop.f32.mrf.mxu0
    %v969 = vadd.f32 0.0, %v968
    %970 = vdwg.mxu0
    %v971 = vmul.f32 %v896, 0.1
    %v972 = vmul.f32 %v898, 0.1
    %v973 = vmul.f32 %v967, 0.1
    %v974 = vmul.f32 %v969, 0.1
    %v975 = vadd.f32 %v971, %v55
    %v976 = vadd.f32 %v972, %v60
    %v977 = vadd.f32 %v973, %v56
    %v978 = vadd.f32 %v974, %v61
    %v983 = vcombine.low %v975, %v976
    %v984 = vcombine.low %v977, %v978
    %987 = vst [vmem:[#allocation8] sm:$0xff] %v983
    %988 = vst [vmem:[#allocation8 + $0x8] sm:$0xff] %v984
    // Predicated region
    $region30: #{tpu_custom_call.1} parent=1 // pred_check
      _
    $region31: #{tpu_custom_call.1} parent=1 // pred_check_branch
      %990 = sbr.rel (0) target = $region33
    $region32: #{tpu_custom_call.1} parent=1 // pred_region
      %s992 = ssub.s32 256, 256
      %993 = vsyncadd [#allocation4], %s992
      %s995 = sshll.u32 [#allocation8], 4
      %s996 = int_to_ptr.vmem [resolvable:$true] %s995
      %998 = dma.vmem_to_hbm [thread:$0]  %s996, 256, %s4, [#allocation4]
    $region33: #{tpu_custom_call.1} parent=1 // pred_fallthru
      _
    // Predicated region
    $region34: #{tpu_custom_call.1} parent=1 // pred_check
      _
    $region35: #{tpu_custom_call.1} parent=1 // pred_check_branch
      %1000 = sbr.rel (0) target = $region37
    $region36: #{tpu_custom_call.1} parent=1 // pred_region
      %1001 = dma.done [#allocation4], 256
    $region37: #{tpu_custom_call.1} parent=1 // pred_fallthru
      _
    %1002 = vsyncpa [#allocation3], 1
    %1003 = vsyncpa [#allocation6], 1
    %1004 = vsyncpa [#allocation4], 1

</llo_original>
